<compile_context>
chip_gen: v7x
topology: tpu7x:2x2x1
jax: 0.10.0
libtpu: 0.0.40
codegen_flags: <defaults>
</compile_context>

<pallas_src>
import functools

import jax
import jax.numpy as jnp
from jax.experimental import pallas as pl
from jax.experimental.pallas import tpu as pltpu

LANE = 128  # TPU lane width


def _round_up(n, m):
    return ((n + m - 1) // m) * m


def linear_kernel(x_ref, w_ref, b_ref, o_ref):
    # x_ref: (TB, IN)        VMEM (IN = 30, full-array block)
    # w_ref: (IN, OUT_PAD)   VMEM (resident across all batch tiles)
    # b_ref: (1, OUT_PAD)    VMEM (resident across all batch tiles)
    # o_ref: (TB, OUT)       VMEM (OUT = 50; masked store, hidden under DMA)
    out_f = o_ref.shape[-1]
    acc = jnp.dot(x_ref[...], w_ref[...], preferred_element_type=jnp.float32)
    o_ref[...] = (acc + b_ref[...])[:, :out_f]


def prepare_linear_params(weight, bias):
    """One-time parameter prep (done at init, NOT per forward call).

    weight: (out_f, in_f) PyTorch nn.Linear layout
    bias:   (out_f,)
    Returns weight transposed to (in_f, OUT_PAD) and bias as (1, OUT_PAD),
    zero-padded on the output-feature dim to a multiple of 128 (lane-dense
    MXU operand; the kernel slices the accumulator back to out_f).
    """
    out_f, in_f = weight.shape
    out_pad = _round_up(out_f, LANE)
    wt = jnp.pad(weight.T.astype(jnp.float32), ((0, 0), (0, out_pad - out_f)))
    b2 = jnp.pad(bias.astype(jnp.float32), (0, out_pad - out_f)).reshape(1, out_pad)
    return wt, b2


@functools.partial(jax.jit, static_argnames=("out_features", "block_b"))
def net_forward(x, wt_pad, b_pad, *, out_features, block_b=4096):
    """y = x @ weight.T + bias  (weight pre-transposed/padded by prepare_linear_params).

    x:      (B, in_f) float32
    wt_pad: (in_f, OUT_PAD) float32
    b_pad:  (1, OUT_PAD) float32
    returns (B, out_features) float32
    """
    B, in_f = x.shape
    in_f_w, out_pad = wt_pad.shape
    assert in_f == in_f_w

    # Batch-only tiling; tb is a multiple of 8, so blocks are legal for any B
    # and Pallas handles the ragged last block (no host-side padding of x).
    # block_b=4096 fits v5e's default scoped VMEM; sweep to 8192 on v6e/v7x.
    tb = min(block_b, _round_up(B, 8))
    grid = (pl.cdiv(B, tb),)

    cost = pl.CostEstimate(
        flops=2 * B * in_f * out_features,
        bytes_accessed=4 * (B * in_f + in_f * out_pad + out_pad + B * out_features),
        transcendentals=0,
    )

    return pl.pallas_call(
        linear_kernel,
        out_shape=jax.ShapeDtypeStruct((B, out_features), jnp.float32),
        grid=grid,
        in_specs=[
            # x: one batch tile per grid step.
            pl.BlockSpec((tb, in_f), lambda i: (i, 0)),
            # weight: constant index_map -> stays resident in VMEM.
            pl.BlockSpec((in_f, out_pad), lambda i: (0, 0)),
            # bias: constant index_map -> stays resident in VMEM.
            pl.BlockSpec((1, out_pad), lambda i: (0, 0)),
        ],
        # Output block last dim equals the full array dim (50) -> legal, and
        # the kernel writes the real output width (no padded writeback/slice).
        out_specs=pl.BlockSpec((tb, out_features), lambda i: (i, 0)),
        compiler_params=pltpu.CompilerParams(
            dimension_semantics=("parallel",),  # 2 TCs on v7x; no-op on v5e/v6e
        ),
        cost_estimate=cost,
    )(x, wt_pad, b_pad)


if __name__ == "__main__":
    key = jax.random.PRNGKey(0)
    kx, kw, kb = jax.random.split(key, 3)

    B, IN, OUT = 8, 30, 50

    # Deterministic init mimicking nn.Linear's uniform(-1/sqrt(IN), 1/sqrt(IN)).
    bound = 1.0 / (IN ** 0.5)
    weight = jax.random.uniform(kw, (OUT, IN), jnp.float32, -bound, bound)
    bias = jax.random.uniform(kb, (OUT,), jnp.float32, -bound, bound)
    x = jax.random.normal(kx, (B, IN), jnp.float32)

    # One-time parameter prep (transpose + pad), kept out of the forward path.
    wt_pad, b_pad = prepare_linear_params(weight, bias)
    wt_pad, b_pad = jax.block_until_ready((wt_pad, b_pad))

    y = net_forward(x, wt_pad, b_pad, out_features=OUT)
    y = jax.block_until_ready(y)

    # Sanity check against plain-JAX reference.
    y_ref = x @ weight.T + bias
    assert y.shape == (B, OUT)
    assert jnp.allclose(y, y_ref, atol=1e-5, rtol=1e-5)

    print("KERNEL_OK")
</pallas_src>

<mosaic_0001>
module attributes {stable_mosaic.version = 11 : i64} {
  func.func @linear_kernel(%arg0: i32, %arg1: memref<8x30xf32, #tpu.memory_space<vmem>>, %arg2: memref<30x128xf32, #tpu.memory_space<vmem>>, %arg3: memref<1x128xf32, #tpu.memory_space<vmem>>, %arg4: memref<8x50xf32, #tpu.memory_space<vmem>>) attributes {dimension_semantics = [#tpu.dimension_semantics<parallel>], iteration_bounds = array<i64: 1>, scalar_prefetch = 0 : i64, scratch_operands = 0 : i64, tpu.core_type = #tpu.core_type<tc>, window_params = [{transform_indices = @transform_0, window_bounds = array<i64: 8, 30>}, {pipeline_mode = #tpu.pipeline_mode<synchronous>, transform_indices = @transform_1, window_bounds = array<i64: 30, 128>}, {pipeline_mode = #tpu.pipeline_mode<synchronous>, transform_indices = @transform_2, window_bounds = array<i64: 1, 128>}, {transform_indices = @transform_3, window_bounds = array<i64: 8, 50>}]} {
    %c0 = arith.constant 0 : index
    %c0_0 = arith.constant 0 : index
    %0 = vector.load %arg1[%c0, %c0_0] : memref<8x30xf32, #tpu.memory_space<vmem>>, vector<8x30xf32>
    %c0_1 = arith.constant 0 : index
    %c0_2 = arith.constant 0 : index
    %1 = vector.load %arg2[%c0_1, %c0_2] : memref<30x128xf32, #tpu.memory_space<vmem>>, vector<30x128xf32>
    %cst = arith.constant dense<0.000000e+00> : vector<8x128xf32>
    %2 = tpu.matmul %0, %1, %cst {dimension_numbers = #tpu.dot_dimension_numbers<[1], [0], [0], [1], [0, 0, 1, 1], [], []>} : vector<8x30xf32>, vector<30x128xf32>, vector<8x128xf32> -> vector<8x128xf32>
    %c0_3 = arith.constant 0 : index
    %c0_4 = arith.constant 0 : index
    %3 = vector.load %arg3[%c0_3, %c0_4] : memref<1x128xf32, #tpu.memory_space<vmem>>, vector<1x128xf32>
    %4 = vector.broadcast %3 : vector<1x128xf32> to vector<8x128xf32>
    %5 = arith.addf %2, %4 : vector<8x128xf32>
    %6 = vector.extract_strided_slice %5 {offsets = [0, 0], sizes = [8, 50], strides = [1, 1]} : vector<8x128xf32> to vector<8x50xf32>
    %c0_5 = arith.constant 0 : index
    %c0_6 = arith.constant 0 : index
    %7 = vector.load %arg4[%c0_5, %c0_6] : memref<8x50xf32, #tpu.memory_space<vmem>>, vector<8x50xf32>
    tpu.vector_store %arg4[%c0_5, %c0_6], %6 {strides = array<i32>} : memref<8x50xf32, #tpu.memory_space<vmem>>, vector<8x50xf32>,
    return
  }
  func.func @transform_0(%arg0: i32) -> (i32, i32) {
    %c0_i32 = arith.constant 0 : i32
    %c0_i32_0 = arith.constant 0 : i32
    return %arg0, %c0_i32 : i32, i32
  }
  func.func @transform_1(%arg0: i32) -> (i32, i32) {
    %c0_i32 = arith.constant 0 : i32
    %c0_i32_0 = arith.constant 0 : i32
    %c0_i32_1 = arith.constant 0 : i32
    return %c0_i32, %c0_i32_0 : i32, i32
  }
  func.func @transform_2(%arg0: i32) -> (i32, i32) {
    %c0_i32 = arith.constant 0 : i32
    %c0_i32_0 = arith.constant 0 : i32
    %c0_i32_1 = arith.constant 0 : i32
    return %c0_i32, %c0_i32_0 : i32, i32
  }
  func.func @transform_3(%arg0: i32) -> (i32, i32) {
    %c0_i32 = arith.constant 0 : i32
    %c0_i32_0 = arith.constant 0 : i32
    return %arg0, %c0_i32 : i32, i32
  }
}

</mosaic_0001>

<llo_original>
// kernel: net_forward.1
$region0: #{net_forward.1}
  #allocation0 [shape = 'u32[]', space=smem, size = 0x4, offset = 0x4, fixed_abs, tag = 'smem constant byte address 0x4 - core index']
  #allocation1 [shape = 'u32[144,128]{1,0:T(1,128)}', space=vmem, size = 0x12000, scoped, tag = 'internal scratch']
  %s0 = inlined_call_operand.hbm [shape: f32[8,30], index: 0, kind: input, shape index: {}]
  %s1 = inlined_call_operand.hbm [shape: f32[30,128], index: 1, kind: input, shape index: {}]
  %s2 = inlined_call_operand.vmem [shape: f32[1,128], index: 2, kind: input, shape index: {}]
  %s3 = inlined_call_operand.hbm [shape: f32[8,50], index: 3, kind: output, shape index: {}]
  %s4 = sld [smem:[#allocation0]]
  $region30: #{net_forward.1} parent=0
    _
  %s6 = ssub.s32 1, %s4
  %s7 = scalar_select 0, %s6, %s4
  $region1: #{net_forward.1} parent=0
    #allocation2 [shape = 'u8[4096]{0}', space=vmem, size = 0x1000, scoped, tag = 'input window, operand 0, single buffered']
    #allocation3 [shape = 's32[1]{0}', space=sflag, size = 0x4, scoped, tag = 'scoped memory for net_forward.1']
    #allocation4 [shape = 's32[1]{0}', space=sflag, size = 0x4, scoped, tag = 'scoped memory for net_forward.1']
    #allocation5 [shape = 'u8[16384]{0}', space=vmem, size = 0x4000, scoped, tag = 'input window, operand 1, single buffered']
    #allocation6 [shape = 's32[1]{0}', space=sflag, size = 0x4, scoped, tag = 'scoped memory for net_forward.1']
    #allocation7 [shape = 'u8[4096]{0}', space=vmem, size = 0x1000, scoped, tag = 'output window, operand 0, single buffered']
    %8 = vsyncpa [#allocation3], 0
    %9 = vsyncpa [#allocation6], 0
    %10 = vsyncpa [#allocation4], 0
    // Predicated region
    $region2: #{net_forward.1} parent=1 // pred_check
      _
    $region3: #{net_forward.1} parent=1 // pred_check_branch
      %12 = sbr.rel (0) target = $region5
    $region4: #{net_forward.1} parent=1 // pred_region
      %s14 = ssub.s32 128, 128
      %15 = vsyncadd [#allocation3], %s14
      %s17 = sshll.u32 [#allocation2], 4
      %s18 = int_to_ptr.vmem [resolvable:$true] %s17
      %20 = dma.hbm_to_vmem [thread:$0]  %s0, 128, %s18, [#allocation3]
    $region5: #{net_forward.1} parent=1 // pred_fallthru
      _
    // Predicated region
    $region6: #{net_forward.1} parent=1 // pred_check
      _
    $region7: #{net_forward.1} parent=1 // pred_check_branch
      %22 = sbr.rel (0) target = $region9
    $region8: #{net_forward.1} parent=1 // pred_region
      %s24 = ssub.s32 512, 512
      %25 = vsyncadd [#allocation6], %s24
      %s26 = sshll.u32 [#allocation5], 4
      %s27 = int_to_ptr.vmem [resolvable:$true] %s26
      %32 = dma.hbm_to_vmem [thread:$0]  %s1, 512, %s27, [#allocation6], 128, 128, 8
    $region9: #{net_forward.1} parent=1 // pred_fallthru
      _
    // Predicated region
    $region10: #{net_forward.1} parent=1 // pred_check
      _
    $region11: #{net_forward.1} parent=1 // pred_check_branch
      %34 = sbr.rel (0) target = $region13
    $region12: #{net_forward.1} parent=1 // pred_region
      _
    $region13: #{net_forward.1} parent=1 // pred_fallthru
      _
    // Predicated region
    $region14: #{net_forward.1} parent=1 // pred_check
      _
    $region15: #{net_forward.1} parent=1 // pred_check_branch
      %36 = sbr.rel (0) target = $region17
    $region16: #{net_forward.1} parent=1 // pred_region
      %37 = dma.done [#allocation3], 128
    $region17: #{net_forward.1} parent=1 // pred_fallthru
      _
    // Predicated region
    $region18: #{net_forward.1} parent=1 // pred_check
      _
    $region19: #{net_forward.1} parent=1 // pred_check_branch
      %39 = sbr.rel (0) target = $region21
    $region20: #{net_forward.1} parent=1 // pred_region
      %40 = dma.done [#allocation6], 512
    $region21: #{net_forward.1} parent=1 // pred_fallthru
      _
    %v41 = vld [vmem:[#allocation2] sm:$0xff]
    %v42 = vld [vmem:[#allocation5] sm:$0xff]
    %v43 = vld [vmem:[#allocation5 + $0x8] sm:$0xff]
    %v44 = vld [vmem:[#allocation5 + $0x10] sm:$0xff]
    %v45 = vld [vmem:[#allocation5 + $0x18] sm:$0x3f]
    %v46 = vld [vmem:[%s2] sm:$0x1]
    %v48 = vlaneseq
    %v49 = vshrl.u32 %v48, 7
    %v50 = vsub.s32 0, %v49
    %v51 = vrot.slane %v46, %v50
    %vm53 = vcmask 244736
    %v55 = vsel %vm53, %v41, 0
    %vm57 = vcmask 1045504
    %v59 = vsel %vm57, %v45, 0
    %61 = vmatprep.subr.mxu0 0.0
    %62 = vmatpush1.msra.mxu0 %v42
    %63 = vmatprep.subr.mxu0 0.0
    %64 = vmatpush1.msra.mxu0 %v43
    %65 = vmatprep.subr.mxu0 0.0
    %66 = vmatpush1.msra.mxu0 %v44
    %67 = vmatprep.subr.mxu0 0.0
    %68 = vmatpush1.msra.mxu0 %v59
    %69 = vmatprep.subr.mxu0 0.0
    %70 = vmatpush1.msra.mxu0 0.0
    %71 = vmatprep.subr.mxu0 0.0
    %72 = vmatpush1.msra.mxu0 0.0
    %73 = vmatprep.subr.mxu0 0.0
    %74 = vmatpush1.msra.mxu0 0.0
    %75 = vmatprep.subr.mxu0 0.0
    %76 = vmatpush1.msra.mxu0 0.0
    %77 = vmatprep.subr.mxu0 0.0
    %78 = vmatpush1.msra.mxu0 0.0
    %79 = vmatprep.subr.mxu0 0.0
    %80 = vmatpush1.msra.mxu0 0.0
    %81 = vmatprep.subr.mxu0 0.0
    %82 = vmatpush1.msra.mxu0 0.0
    %83 = vmatprep.subr.mxu0 0.0
    %84 = vmatpush1.msra.mxu0 0.0
    %85 = vmatprep.subr.mxu0 0.0
    %86 = vmatpush1.msra.mxu0 0.0
    %87 = vmatprep.subr.mxu0 0.0
    %88 = vmatpush1.msra.mxu0 0.0
    %89 = vmatprep.subr.mxu0 0.0
    %90 = vmatpush1.msra.mxu0 0.0
    %91 = vmatprep.subr.mxu0 0.0
    %92 = vmatpush1.msra.mxu0 0.0
    %93 = vmatprep.subr.mxu0 0.0
    %94 = vmatpush1.msra.mxu0 0.0
    %95 = vmatprep.subr.mxu0 0.0
    %96 = vmatpush1.msra.mxu0 0.0
    %97 = vmatprep.subr.mxu0 0.0
    %98 = vmatpush1.msra.mxu0 0.0
    %99 = vmatprep.subr.mxu0 0.0
    %100 = vmatpush1.msra.mxu0 0.0
    %101 = vmatprep.subr.mxu0 0.0
    %102 = vmatpush1.msra.mxu0 0.0
    %103 = vmatprep.subr.mxu0 0.0
    %104 = vmatpush1.msra.mxu0 0.0
    %105 = vmatprep.subr.mxu0 0.0
    %106 = vmatpush1.msra.mxu0 0.0
    %107 = vmatprep.subr.mxu0 0.0
    %108 = vmatpush1.msra.mxu0 0.0
    %109 = vmatprep.subr.mxu0 0.0
    %110 = vmatpush1.msra.mxu0 0.0
    %111 = vmatprep.subr.mxu0 0.0
    %112 = vmatpush1.msra.mxu0 0.0
    %113 = vmatprep.subr.mxu0 0.0
    %114 = vmatpush1.msra.mxu0 0.0
    %115 = vmatprep.subr.mxu0 0.0
    %116 = vmatpush1.msra.mxu0 0.0
    %117 = vmatprep.subr.mxu0 0.0
    %118 = vmatpush1.msra.mxu0 0.0
    %119 = vmatprep.subr.mxu0 0.0
    %120 = vmatpush1.msra.mxu0 0.0
    %121 = vmatprep.subr.mxu0 0.0
    %122 = vmatpush1.msra.mxu0 0.0
    %123 = vmatprep.subr.mxu0 0.0
    %124 = vmatpush1.msra.mxu0 0.0
    %125 = vmatprep.mubr.f32.mxu0 0.0
    %126 = vmatmul.mubr.f32.gmra.mrb[0].mxu0 %v55
    %v127 = vpop.f32.mrb[0].mxu0
    %v128 = vadd.f32 %v51, %v127
    %v129 = vpop.f32.mrb[0].mxu0
    %130 = vdwg.mxu0
    %vm131 = vcmask 408576
    %132 = vst.msk [vmem:[#allocation7] sm:$0xff] %vm131, %v128
    // Predicated region
    $region22: #{net_forward.1} parent=1 // pred_check
      _
    $region23: #{net_forward.1} parent=1 // pred_check_branch
      %134 = sbr.rel (0) target = $region25
    $region24: #{net_forward.1} parent=1 // pred_region
      %s136 = ssub.s32 128, 128
      %137 = vsyncadd [#allocation4], %s136
      %s139 = sshll.u32 [#allocation7], 4
      %s140 = int_to_ptr.vmem [resolvable:$true] %s139
      %142 = dma.vmem_to_hbm [thread:$0]  %s140, 128, %s3, [#allocation4]
    $region25: #{net_forward.1} parent=1 // pred_fallthru
      _
    // Predicated region
    $region26: #{net_forward.1} parent=1 // pred_check
      _
    $region27: #{net_forward.1} parent=1 // pred_check_branch
      %144 = sbr.rel (0) target = $region29
    $region28: #{net_forward.1} parent=1 // pred_region
      %145 = dma.done [#allocation4], 128
    $region29: #{net_forward.1} parent=1 // pred_fallthru
      _
    %146 = vsyncpa [#allocation3], 1
    %147 = vsyncpa [#allocation6], 1
    %148 = vsyncpa [#allocation4], 1

</llo_original>
